<compile_context>
chip_gen: v7x
topology: tpu7x:2x2x1
jax: 0.10.0
libtpu: 0.0.40
codegen_flags: <defaults>
</compile_context>

<pallas_src>
import functools

import jax
import jax.numpy as jnp
from jax.experimental import pallas as pl
from jax.experimental.pallas import tpu as pltpu


def _fused_deconv_bn_relu_kernel(
    xt_ref, wt_ref, g_ref, gamma_ref, beta_ref,    # inputs
    o_ref,                                         # output
    sum_sc, sq_sc, scale_sc, shift_sc,             # VMEM scratch (persist across grid)
    *, inv_n, eps,
):
    p = pl.program_id(0)      # phase: 0 = stats, 1 = normalize + write
    j = pl.program_id(1)      # row tile of M
    nt = pl.num_programs(1)

    # Transposed conv as matmul: (C4, Cin) @ (Cin, tm) -> (C4, tm).
    y = jnp.dot(wt_ref[...], xt_ref[...], preferred_element_type=jnp.float32)

    @pl.when(p == 0)
    def _stats():
        @pl.when(j == 0)
        def _init():
            sum_sc[...] = jnp.zeros_like(sum_sc)
            sq_sc[...] = jnp.zeros_like(sq_sc)

        # Fold the K*K columns of each output channel via the same-channel grouping matrix G,
        # then lane-reduce; scratch holds per-channel sums already expanded to (C4, 1).
        gy = jnp.dot(g_ref[...], y, preferred_element_type=jnp.float32)
        gy2 = jnp.dot(g_ref[...], y * y, preferred_element_type=jnp.float32)
        sum_sc[...] += jnp.sum(gy, axis=1, keepdims=True)
        sq_sc[...] += jnp.sum(gy2, axis=1, keepdims=True)

        @pl.when(j == nt - 1)
        def _finalize():
            mean = sum_sc[...] * inv_n
            # TODO(synk): E[y^2]-E[y]^2 variance can cancel for large activation magnitudes;
            # fine at these scales (bias already removed, which helps).
            var = sq_sc[...] * inv_n - mean * mean
            inv_std = jax.lax.rsqrt(var + eps)
            scale = gamma_ref[...] * inv_std
            scale_sc[...] = scale
            shift_sc[...] = beta_ref[...] - mean * scale

    @pl.when(p == 1)
    def _apply():
        o_ref[...] = jnp.maximum(y * scale_sc[...] + shift_sc[...], 0.0)


def deconv2d_bn_forward(x, weight, bias, gamma, beta, *, eps=1e-5, K=2, tm=512):
    # `bias` is accepted for parity with the PyTorch module but cancels exactly under
    # training-mode BatchNorm, so the kernel does not consume it.
    N, Cin, H, W = x.shape
    Cout = weight.shape[1]
    KK = K * K
    C4 = Cout * KK
    M = N * H * W
    tm = min(tm, M)
    assert tm % 128 == 0 and M % tm == 0, "example sizes chosen so M divides the lane tile"
    nt = M // tm

    # glue: channel-major flatten of the input; tiny weight / BN-param rearrangements.
    x_t = jnp.transpose(x, (1, 0, 2, 3)).reshape(Cin, M).astype(jnp.float32)      # (Cin, M)
    w_t = jnp.transpose(weight.reshape(Cin, C4), (1, 0)).astype(jnp.float32)      # (C4, Cin)
    ch = jnp.arange(C4) // KK
    g_mat = (ch[:, None] == ch[None, :]).astype(jnp.float32)                      # (C4, C4)
    gamma_c = jnp.repeat(gamma.astype(jnp.float32), KK).reshape(C4, 1)
    beta_c = jnp.repeat(beta.astype(jnp.float32), KK).reshape(C4, 1)

    kernel = functools.partial(
        _fused_deconv_bn_relu_kernel, inv_n=1.0 / float(M * KK), eps=float(eps)
    )

    out_t = pl.pallas_call(
        kernel,
        grid_spec=pltpu.PrefetchScalarGridSpec(
            num_scalar_prefetch=0,
            grid=(2, nt),
            in_specs=[
                pl.BlockSpec((Cin, tm), lambda p, j: (0, j)),   # x tile (lane-dense)
                pl.BlockSpec((C4, Cin), lambda p, j: (0, 0)),   # resident weight
                pl.BlockSpec((C4, C4), lambda p, j: (0, 0)),    # resident grouping matrix
                pl.BlockSpec((C4, 1), lambda p, j: (0, 0)),     # gamma (per column)
                pl.BlockSpec((C4, 1), lambda p, j: (0, 0)),     # beta  (per column)
            ],
            # Phase 0 parks the output window on block 0 (nothing is written there), so no
            # garbage writebacks; phase 1 walks the row tiles with lane-dense stores.
            out_specs=pl.BlockSpec((C4, tm), lambda p, j: (0, p * j)),
            scratch_shapes=[pltpu.VMEM((C4, 1), jnp.float32)] * 4,
        ),
        out_shape=jax.ShapeDtypeStruct((C4, M), jnp.float32),
        compiler_params=pltpu.CompilerParams(
            # Phase 1 depends on scratch written in phase 0 -> both axes sequential.
            # TODO(synk): per-core partial stats + "parallel" would use v7x's second TC.
            dimension_semantics=("arbitrary", "arbitrary"),
        ),
    )(x_t, w_t, g_mat, gamma_c, beta_c)

    # glue: (oc, kh, kw, n, h, w) -> NCHW with output spatial (H*K, W*K).
    # TODO(synk): the kh/kw <-> h/w interleave is not tile-rectangular, so it stays in XLA glue.
    out = out_t.reshape(Cout, K, K, N, H, W)
    out = jnp.transpose(out, (3, 0, 4, 1, 5, 2)).reshape(N, Cout, H * K, W * K)
    return out


def reference_forward(x, weight, bias, gamma, beta, *, eps=1e-5, K=2):
    """Pure-JAX reference matching PyTorch deconv2d_bn.forward in training mode."""
    N, Cin, H, W = x.shape
    Cout = weight.shape[1]
    # ConvTranspose2d with stride == kernel_size => non-overlapping 2x2 blocks.
    y = jnp.einsum("nihw,iokl->nohkwl", x, weight, precision=jax.lax.Precision.HIGHEST)
    y = y + bias[None, :, None, None, None, None]
    y = y.reshape(N, Cout, H * K, W * K)
    mean = y.mean(axis=(0, 2, 3), keepdims=True)
    var = y.var(axis=(0, 2, 3), keepdims=True)  # biased, as BN uses for normalization
    y = (y - mean) / jnp.sqrt(var + eps)
    y = y * gamma[None, :, None, None] + beta[None, :, None, None]
    return jnp.maximum(y, 0.0)


if __name__ == "__main__":
    N, Cin, Cout, H, W, K = 2, 4, 8, 16, 16, 2

    key = jax.random.PRNGKey(0)
    kx, kw, kb, kg, kbeta = jax.random.split(key, 5)
    x = jax.random.normal(kx, (N, Cin, H, W), dtype=jnp.float32)
    # ConvTranspose2d weight shape (in_channels, out_channels, kH, kW), with bias.
    weight = 0.2 * jax.random.normal(kw, (Cin, Cout, K, K), dtype=jnp.float32)
    bias = 0.1 * jax.random.normal(kb, (Cout,), dtype=jnp.float32)
    # BatchNorm2d affine params (PyTorch default init is ones/zeros; perturb slightly).
    gamma = 1.0 + 0.1 * jax.random.normal(kg, (Cout,), dtype=jnp.float32)
    beta = 0.1 * jax.random.normal(kbeta, (Cout,), dtype=jnp.float32)
    # TODO(synk): BatchNorm running-stat updates (momentum buffers) are not modeled; only the
    # training-mode forward normalization is reproduced.

    out = deconv2d_bn_forward(x, weight, bias, gamma, beta, K=K)
    out = jax.block_until_ready(out)

    ref = reference_forward(x, weight, bias, gamma, beta, K=K)
    assert out.shape == (N, Cout, H * K, W * K), out.shape
    assert jnp.allclose(out, ref, atol=1e-4, rtol=1e-4), float(jnp.max(jnp.abs(out - ref)))

    print("KERNEL_OK")
</pallas_src>

<mosaic_0001>
module attributes {stable_mosaic.version = 11 : i64} {
  func.func @_fused_deconv_bn_relu_kernel(%arg0: i32, %arg1: i32, %arg2: memref<4x512xf32, #tpu.memory_space<vmem>>, %arg3: memref<32x4xf32, #tpu.memory_space<vmem>>, %arg4: memref<32x32xf32, #tpu.memory_space<vmem>>, %arg5: memref<32x1xf32, #tpu.memory_space<vmem>>, %arg6: memref<32x1xf32, #tpu.memory_space<vmem>>, %arg7: memref<32x512xf32, #tpu.memory_space<vmem>>, %arg8: memref<32x1xf32, #tpu.memory_space<vmem>>, %arg9: memref<32x1xf32, #tpu.memory_space<vmem>>, %arg10: memref<32x1xf32, #tpu.memory_space<vmem>>, %arg11: memref<32x1xf32, #tpu.memory_space<vmem>>) attributes {dimension_semantics = [#tpu.dimension_semantics<arbitrary>, #tpu.dimension_semantics<arbitrary>], iteration_bounds = array<i64: 2, 1>, scalar_prefetch = 0 : i64, scratch_operands = 4 : i64, tpu.core_type = #tpu.core_type<tc>, window_params = [{transform_indices = @transform_0, window_bounds = array<i64: 4, 512>}, {pipeline_mode = #tpu.pipeline_mode<synchronous>, transform_indices = @transform_1, window_bounds = array<i64: 32, 4>}, {pipeline_mode = #tpu.pipeline_mode<synchronous>, transform_indices = @transform_2, window_bounds = array<i64: 32, 32>}, {pipeline_mode = #tpu.pipeline_mode<synchronous>, transform_indices = @transform_3, window_bounds = array<i64: 32, 1>}, {pipeline_mode = #tpu.pipeline_mode<synchronous>, transform_indices = @transform_4, window_bounds = array<i64: 32, 1>}, {transform_indices = @transform_5, window_bounds = array<i64: 32, 512>}]} {
    %c0 = arith.constant 0 : index
    %c0_0 = arith.constant 0 : index
    %0 = vector.load %arg3[%c0, %c0_0] : memref<32x4xf32, #tpu.memory_space<vmem>>, vector<32x4xf32>
    %c0_1 = arith.constant 0 : index
    %c0_2 = arith.constant 0 : index
    %1 = vector.load %arg2[%c0_1, %c0_2] : memref<4x512xf32, #tpu.memory_space<vmem>>, vector<4x512xf32>
    %cst = arith.constant dense<0.000000e+00> : vector<32x512xf32>
    %2 = tpu.matmul %0, %1, %cst {dimension_numbers = #tpu.dot_dimension_numbers<[1], [0], [0], [1], [0, 0, 1, 1], [], []>} : vector<32x4xf32>, vector<4x512xf32>, vector<32x512xf32> -> vector<32x512xf32>
    %c0_i32 = arith.constant 0 : i32
    %3 = arith.cmpi eq, %arg0, %c0_i32 : i32
    %4 = arith.extui %3 : i1 to i32
    %c0_i32_3 = arith.constant 0 : i32
    %5 = arith.cmpi ne, %4, %c0_i32_3 : i32
    scf.if %5 {
      %c0_i32_5 = arith.constant 0 : i32
      %9 = arith.cmpi eq, %arg1, %c0_i32_5 : i32
      %10 = arith.extui %9 : i1 to i32
      %c0_i32_6 = arith.constant 0 : i32
      %11 = arith.cmpi ne, %10, %c0_i32_6 : i32
      scf.if %11 {
        %cst_25 = arith.constant 0.000000e+00 : f32
        %30 = vector.broadcast %cst_25 : f32 to vector<32x1xf32>
        %c0_26 = arith.constant 0 : index
        %c0_27 = arith.constant 0 : index
        %31 = vector.load %arg8[%c0_26, %c0_27] : memref<32x1xf32, #tpu.memory_space<vmem>>, vector<32x1xf32>
        tpu.vector_store %arg8[%c0_26, %c0_27], %30 {strides = array<i32>} : memref<32x1xf32, #tpu.memory_space<vmem>>, vector<32x1xf32>,
        %cst_28 = arith.constant 0.000000e+00 : f32
        %32 = vector.broadcast %cst_28 : f32 to vector<32x1xf32>
        %c0_29 = arith.constant 0 : index
        %c0_30 = arith.constant 0 : index
        %33 = vector.load %arg9[%c0_29, %c0_30] : memref<32x1xf32, #tpu.memory_space<vmem>>, vector<32x1xf32>
        tpu.vector_store %arg9[%c0_29, %c0_30], %32 {strides = array<i32>} : memref<32x1xf32, #tpu.memory_space<vmem>>, vector<32x1xf32>,
      } else {
      }
      %c0_7 = arith.constant 0 : index
      %c0_8 = arith.constant 0 : index
      %12 = vector.load %arg4[%c0_7, %c0_8] : memref<32x32xf32, #tpu.memory_space<vmem>>, vector<32x32xf32>
      %cst_9 = arith.constant dense<0.000000e+00> : vector<32x512xf32>
      %13 = tpu.matmul %12, %2, %cst_9 {dimension_numbers = #tpu.dot_dimension_numbers<[1], [0], [0], [1], [0, 0, 1, 1], [], []>} : vector<32x32xf32>, vector<32x512xf32>, vector<32x512xf32> -> vector<32x512xf32>
      %c0_10 = arith.constant 0 : index
      %c0_11 = arith.constant 0 : index
      %14 = vector.load %arg4[%c0_10, %c0_11] : memref<32x32xf32, #tpu.memory_space<vmem>>, vector<32x32xf32>
      %15 = arith.mulf %2, %2 : vector<32x512xf32>
      %cst_12 = arith.constant dense<0.000000e+00> : vector<32x512xf32>
      %16 = tpu.matmul %14, %15, %cst_12 {dimension_numbers = #tpu.dot_dimension_numbers<[1], [0], [0], [1], [0, 0, 1, 1], [], []>} : vector<32x32xf32>, vector<32x512xf32>, vector<32x512xf32> -> vector<32x512xf32>
      %c0_13 = arith.constant 0 : index
      %c0_14 = arith.constant 0 : index
      %17 = vector.load %arg8[%c0_13, %c0_14] : memref<32x1xf32, #tpu.memory_space<vmem>>, vector<32x1xf32>
      %cst_15 = arith.constant dense<0.000000e+00> : vector<32xf32>
      %18 = vector.multi_reduction <add>, %13, %cst_15 [1] : vector<32x512xf32> to vector<32xf32>
      %19 = vector.shape_cast %18 : vector<32xf32> to vector<32x1xf32>
      %20 = arith.addf %17, %19 : vector<32x1xf32>
      %c0_16 = arith.constant 0 : index
      %c0_17 = arith.constant 0 : index
      %21 = vector.load %arg8[%c0_16, %c0_17] : memref<32x1xf32, #tpu.memory_space<vmem>>, vector<32x1xf32>
      tpu.vector_store %arg8[%c0_16, %c0_17], %20 {strides = array<i32>} : memref<32x1xf32, #tpu.memory_space<vmem>>, vector<32x1xf32>,
      %c0_18 = arith.constant 0 : index
      %c0_19 = arith.constant 0 : index
      %22 = vector.load %arg9[%c0_18, %c0_19] : memref<32x1xf32, #tpu.memory_space<vmem>>, vector<32x1xf32>
      %cst_20 = arith.constant dense<0.000000e+00> : vector<32xf32>
      %23 = vector.multi_reduction <add>, %16, %cst_20 [1] : vector<32x512xf32> to vector<32xf32>
      %24 = vector.shape_cast %23 : vector<32xf32> to vector<32x1xf32>
      %25 = arith.addf %22, %24 : vector<32x1xf32>
      %c0_21 = arith.constant 0 : index
      %c0_22 = arith.constant 0 : index
      %26 = vector.load %arg9[%c0_21, %c0_22] : memref<32x1xf32, #tpu.memory_space<vmem>>, vector<32x1xf32>
      tpu.vector_store %arg9[%c0_21, %c0_22], %25 {strides = array<i32>} : memref<32x1xf32, #tpu.memory_space<vmem>>, vector<32x1xf32>,
      %c0_i32_23 = arith.constant 0 : i32
      %27 = arith.cmpi eq, %arg1, %c0_i32_23 : i32
      %28 = arith.extui %27 : i1 to i32
      %c0_i32_24 = arith.constant 0 : i32
      %29 = arith.cmpi ne, %28, %c0_i32_24 : i32
      scf.if %29 {
        %c0_25 = arith.constant 0 : index
        %c0_26 = arith.constant 0 : index
        %30 = vector.load %arg8[%c0_25, %c0_26] : memref<32x1xf32, #tpu.memory_space<vmem>>, vector<32x1xf32>
        %cst_27 = arith.constant 4.8828125E-4 : f32
        %31 = vector.broadcast %cst_27 : f32 to vector<32x1xf32>
        %32 = arith.mulf %30, %31 : vector<32x1xf32>
        %c0_28 = arith.constant 0 : index
        %c0_29 = arith.constant 0 : index
        %33 = vector.load %arg9[%c0_28, %c0_29] : memref<32x1xf32, #tpu.memory_space<vmem>>, vector<32x1xf32>
        %cst_30 = arith.constant 4.8828125E-4 : f32
        %34 = vector.broadcast %cst_30 : f32 to vector<32x1xf32>
        %35 = arith.mulf %33, %34 : vector<32x1xf32>
        %36 = arith.mulf %32, %32 : vector<32x1xf32>
        %37 = arith.subf %35, %36 : vector<32x1xf32>
        %cst_31 = arith.constant 9.99999974E-6 : f32
        %38 = vector.broadcast %cst_31 : f32 to vector<32x1xf32>
        %39 = arith.addf %37, %38 : vector<32x1xf32>
        %40 = math.rsqrt %39 : vector<32x1xf32>
        %c0_32 = arith.constant 0 : index
        %c0_33 = arith.constant 0 : index
        %41 = vector.load %arg5[%c0_32, %c0_33] : memref<32x1xf32, #tpu.memory_space<vmem>>, vector<32x1xf32>
        %42 = arith.mulf %41, %40 : vector<32x1xf32>
        %c0_34 = arith.constant 0 : index
        %c0_35 = arith.constant 0 : index
        %43 = vector.load %arg10[%c0_34, %c0_35] : memref<32x1xf32, #tpu.memory_space<vmem>>, vector<32x1xf32>
        tpu.vector_store %arg10[%c0_34, %c0_35], %42 {strides = array<i32>} : memref<32x1xf32, #tpu.memory_space<vmem>>, vector<32x1xf32>,
        %c0_36 = arith.constant 0 : index
        %c0_37 = arith.constant 0 : index
        %44 = vector.load %arg6[%c0_36, %c0_37] : memref<32x1xf32, #tpu.memory_space<vmem>>, vector<32x1xf32>
        %45 = arith.mulf %32, %42 : vector<32x1xf32>
        %46 = arith.subf %44, %45 : vector<32x1xf32>
        %c0_38 = arith.constant 0 : index
        %c0_39 = arith.constant 0 : index
        %47 = vector.load %arg11[%c0_38, %c0_39] : memref<32x1xf32, #tpu.memory_space<vmem>>, vector<32x1xf32>
        tpu.vector_store %arg11[%c0_38, %c0_39], %46 {strides = array<i32>} : memref<32x1xf32, #tpu.memory_space<vmem>>, vector<32x1xf32>,
      } else {
      }
    } else {
    }
    %c1_i32 = arith.constant 1 : i32
    %6 = arith.cmpi eq, %arg0, %c1_i32 : i32
    %7 = arith.extui %6 : i1 to i32
    %c0_i32_4 = arith.constant 0 : i32
    %8 = arith.cmpi ne, %7, %c0_i32_4 : i32
    scf.if %8 {
      %c0_5 = arith.constant 0 : index
      %c0_6 = arith.constant 0 : index
      %9 = vector.load %arg10[%c0_5, %c0_6] : memref<32x1xf32, #tpu.memory_space<vmem>>, vector<32x1xf32>
      %10 = vector.broadcast %9 : vector<32x1xf32> to vector<32x512xf32>
      %11 = arith.mulf %2, %10 : vector<32x512xf32>
      %c0_7 = arith.constant 0 : index
      %c0_8 = arith.constant 0 : index
      %12 = vector.load %arg11[%c0_7, %c0_8] : memref<32x1xf32, #tpu.memory_space<vmem>>, vector<32x1xf32>
      %13 = vector.broadcast %12 : vector<32x1xf32> to vector<32x512xf32>
      %14 = arith.addf %11, %13 : vector<32x512xf32>
      %cst_9 = arith.constant 0.000000e+00 : f32
      %15 = vector.broadcast %cst_9 : f32 to vector<32x512xf32>
      %16 = arith.maximumf %14, %15 : vector<32x512xf32>
      %c0_10 = arith.constant 0 : index
      %c0_11 = arith.constant 0 : index
      %17 = vector.load %arg7[%c0_10, %c0_11] : memref<32x512xf32, #tpu.memory_space<vmem>>, vector<32x512xf32>
      tpu.vector_store %arg7[%c0_10, %c0_11], %16 {strides = array<i32>} : memref<32x512xf32, #tpu.memory_space<vmem>>, vector<32x512xf32>,
    } else {
    }
    return
  }
  func.func @transform_0(%arg0: i32, %arg1: i32) -> (i32, i32) {
    %c0_i32 = arith.constant 0 : i32
    %c0_i32_0 = arith.constant 0 : i32
    return %c0_i32, %arg1 : i32, i32
  }
  func.func @transform_1(%arg0: i32, %arg1: i32) -> (i32, i32) {
    %c0_i32 = arith.constant 0 : i32
    %c0_i32_0 = arith.constant 0 : i32
    %c0_i32_1 = arith.constant 0 : i32
    return %c0_i32, %c0_i32_0 : i32, i32
  }
  func.func @transform_2(%arg0: i32, %arg1: i32) -> (i32, i32) {
    %c0_i32 = arith.constant 0 : i32
    %c0_i32_0 = arith.constant 0 : i32
    %c0_i32_1 = arith.constant 0 : i32
    return %c0_i32, %c0_i32_0 : i32, i32
  }
  func.func @transform_3(%arg0: i32, %arg1: i32) -> (i32, i32) {
    %c0_i32 = arith.constant 0 : i32
    %c0_i32_0 = arith.constant 0 : i32
    %c0_i32_1 = arith.constant 0 : i32
    return %c0_i32, %c0_i32_0 : i32, i32
  }
  func.func @transform_4(%arg0: i32, %arg1: i32) -> (i32, i32) {
    %c0_i32 = arith.constant 0 : i32
    %c0_i32_0 = arith.constant 0 : i32
    %c0_i32_1 = arith.constant 0 : i32
    return %c0_i32, %c0_i32_0 : i32, i32
  }
  func.func @transform_5(%arg0: i32, %arg1: i32) -> (i32, i32) {
    %0 = arith.muli %arg0, %arg1 : i32
    %c0_i32 = arith.constant 0 : i32
    %c0_i32_0 = arith.constant 0 : i32
    return %c0_i32, %0 : i32, i32
  }
}

</mosaic_0001>

<llo_original>
// kernel: tpu_custom_call.1
$region0: #{tpu_custom_call.1}
  #allocation0 [shape = 'u32[]', space=smem, size = 0x4, offset = 0x4, fixed_abs, tag = 'smem constant byte address 0x4 - core index']
  #allocation1 [shape = 'u32[144,128]{1,0:T(1,128)}', space=vmem, size = 0x12000, scoped, tag = 'internal scratch']
  #allocation2 [shape = 'f32[32,1]{1,0:T(8,128)}', space=vmem, size = 0x4000, scoped, tag = 'scratch operand']
  #allocation3 [shape = 'f32[32,1]{1,0:T(8,128)}', space=vmem, size = 0x4000, scoped, tag = 'scratch operand']
  #allocation4 [shape = 'f32[32,1]{1,0:T(8,128)}', space=vmem, size = 0x4000, scoped, tag = 'scratch operand']
  #allocation5 [shape = 'f32[32,1]{1,0:T(8,128)}', space=vmem, size = 0x4000, scoped, tag = 'scratch operand']
  %s0 = inlined_call_operand.vmem [shape: f32[4,512], index: 0, kind: input, shape index: {}]
  %s1 = inlined_call_operand.vmem [shape: f32[32,4], index: 1, kind: input, shape index: {}]
  %s2 = inlined_call_operand.vmem [shape: f32[32,32], index: 2, kind: input, shape index: {}]
  %s3 = inlined_call_operand.vmem [shape: f32[32,1], index: 3, kind: input, shape index: {}]
  %s4 = inlined_call_operand.vmem [shape: f32[32,1], index: 4, kind: input, shape index: {}]
  %s5 = inlined_call_operand.hbm [shape: f32[32,512], index: 5, kind: output, shape index: {}]
  %s6 = sld [smem:[#allocation0]]
  $region69: #{tpu_custom_call.1} parent=0
    _
  %s8 = ssub.s32 1, %s6
  %s9 = scalar_select 0, %s8, %s6
  $region1: #{tpu_custom_call.1} parent=0
    #allocation6 [shape = 'u8[131072]{0}', space=vmem, size = 0x20000, scoped, tag = 'output window, operand 0']
    #allocation7 [shape = 's32[2]{0}', space=sflag, size = 0x8, scoped, tag = 'scoped memory for tpu_custom_call.1']
    %10 = vsyncpa [#allocation7], 0
    %s11 = scalar_lea.sflag [#allocation7], 1
    %12 = vsyncpa %s11, 0
    loop: start=0, step=1, limit=4
    $region2: #{tpu_custom_call.1} parent=1 // loop_pre_header
      _
    $region3: #{tpu_custom_call.1} parent=1 // loop_header
      %s14 = sphi 0, %s18
      %p15 = scmp.ge.s32.totalorder %s14, 4
      %s21 = sphi 0, %s33
      %s22 = sphi 0, %s29
      %s23 = sphi 0, %s21
      %s24 = sphi 0, %s22
      %s25 = sphi 0, %s23
      %s26 = sphi 0, %s24
      %s36 = sphi 0, %s38
      %s39 = sphi 0, %s36
      %s40 = sphi 0, %s39
      %s56 = sphi 0, %s40
      %s60 = sphi 0, %s60
      %s62 = sphi 0, %s60
      %s63 = sphi 0, %s62
      %s77 = sphi 0, %s63
      %s81 = sphi 0, %s81
      %s83 = sphi 0, %s81
      %s84 = sphi 0, %s83
      %s98 = sphi 0, %s84
      %s102 = sphi 0, %s102
      %s104 = sphi 0, %s102
      %s105 = sphi 0, %s104
      %s119 = sphi 0, %s105
      %s123 = sphi 0, %s123
      %s125 = sphi 0, %s123
      %s126 = sphi 0, %s125
      %s140 = sphi 0, %s126
      %s148 = sphi 0, %s150
      %s151 = sphi 0, %s148
      %s152 = sphi 0, %s151
      %s168 = sphi 0, %s152
    $region4: #{tpu_custom_call.1} parent=1 // loop_header_branch
      %17 = sbr.rel (%p15) target = $region8
    $region5: #{tpu_custom_call.1} parent=1 // loop_body
      %s19 = ssub.s32 %s14, 1
      %s20 = ssub.s32 %s14, 2
      %s27 = sadd.s32 1, %s22
      %p28 = scmp.ge.s32.totalorder %s27, 1
      %s29 = scalar_select %p28, 0, %s27
      %s30 = sadd.s32 1, %s21
      %s31 = scalar_select %p28, %s30, %s21
      %p32 = scmp.ge.s32.totalorder %s31, 2
      %s33 = scalar_select %p32, 0, %s31
      %s34 = ssub.s32 %s22, %s29
      %p35 = scmp.eq.s32.totalorder %s34, 0
      %s37 = sadd.s32 %s36, 1
      %s38 = scalar_select %p35, %s36, %s37
      %p41 = pneg %p35
      %p42 = scmp.eq.s32.totalorder %s14, 1
      %p43 = por %p41, %p42
      %p44 = scmp.ne.s32.totalorder %s36, %s39
      %p45 = scmp.eq.s32.totalorder %s14, 0
      %p46 = por %p44, %p45
      %p47 = scmp.ne.s32.totalorder %s36, %s39
      %p48 = scmp.eq.s32.totalorder %s19, 1
      %p49 = por %p47, %p48
      %p50 = scmp.ne.s32.totalorder %s39, %s40
      %p51 = scmp.eq.s32.totalorder %s19, 0
      %p52 = por %p50, %p51
      %p53 = scmp.ne.s32.totalorder %s39, %s40
      %p54 = scmp.eq.s32.totalorder %s20, 1
      %p55 = por %p53, %p54
      %p57 = scmp.ne.s32.totalorder %s40, %s56
      %p58 = scmp.eq.s32.totalorder %s20, 0
      %p59 = por %p57, %p58
      %s61 = sadd.s32 %s60, 1
      %p64 = scmp.eq.s32.totalorder %s14, 1
      %p65 = scmp.ne.s32.totalorder %s60, %s62
      %p66 = scmp.eq.s32.totalorder %s14, 0
      %p67 = por %p65, %p66
      %p68 = scmp.ne.s32.totalorder %s60, %s62
      %p69 = scmp.eq.s32.totalorder %s19, 1
      %p70 = por %p68, %p69
      %p71 = scmp.ne.s32.totalorder %s62, %s63
      %p72 = scmp.eq.s32.totalorder %s19, 0
      %p73 = por %p71, %p72
      %p74 = scmp.ne.s32.totalorder %s62, %s63
      %p75 = scmp.eq.s32.totalorder %s20, 1
      %p76 = por %p74, %p75
      %p78 = scmp.ne.s32.totalorder %s63, %s77
      %p79 = scmp.eq.s32.totalorder %s20, 0
      %p80 = por %p78, %p79
      %s82 = sadd.s32 %s81, 1
      %p85 = scmp.eq.s32.totalorder %s14, 1
      %p86 = scmp.ne.s32.totalorder %s81, %s83
      %p87 = scmp.eq.s32.totalorder %s14, 0
      %p88 = por %p86, %p87
      %p89 = scmp.ne.s32.totalorder %s81, %s83
      %p90 = scmp.eq.s32.totalorder %s19, 1
      %p91 = por %p89, %p90
      %p92 = scmp.ne.s32.totalorder %s83, %s84
      %p93 = scmp.eq.s32.totalorder %s19, 0
      %p94 = por %p92, %p93
      %p95 = scmp.ne.s32.totalorder %s83, %s84
      %p96 = scmp.eq.s32.totalorder %s20, 1
      %p97 = por %p95, %p96
      %p99 = scmp.ne.s32.totalorder %s84, %s98
      %p100 = scmp.eq.s32.totalorder %s20, 0
      %p101 = por %p99, %p100
      %s103 = sadd.s32 %s102, 1
      %p106 = scmp.eq.s32.totalorder %s14, 1
      %p107 = scmp.ne.s32.totalorder %s102, %s104
      %p108 = scmp.eq.s32.totalorder %s14, 0
      %p109 = por %p107, %p108
      %p110 = scmp.ne.s32.totalorder %s102, %s104
      %p111 = scmp.eq.s32.totalorder %s19, 1
      %p112 = por %p110, %p111
      %p113 = scmp.ne.s32.totalorder %s104, %s105
      %p114 = scmp.eq.s32.totalorder %s19, 0
      %p115 = por %p113, %p114
      %p116 = scmp.ne.s32.totalorder %s104, %s105
      %p117 = scmp.eq.s32.totalorder %s20, 1
      %p118 = por %p116, %p117
      %p120 = scmp.ne.s32.totalorder %s105, %s119
      %p121 = scmp.eq.s32.totalorder %s20, 0
      %p122 = por %p120, %p121
      %s124 = sadd.s32 %s123, 1
      %p127 = scmp.eq.s32.totalorder %s14, 1
      %p128 = scmp.ne.s32.totalorder %s123, %s125
      %p129 = scmp.eq.s32.totalorder %s14, 0
      %p130 = por %p128, %p129
      %p131 = scmp.ne.s32.totalorder %s123, %s125
      %p132 = scmp.eq.s32.totalorder %s19, 1
      %p133 = por %p131, %p132
      %p134 = scmp.ne.s32.totalorder %s125, %s126
      %p135 = scmp.eq.s32.totalorder %s19, 0
      %p136 = por %p134, %p135
      %p137 = scmp.ne.s32.totalorder %s125, %s126
      %p138 = scmp.eq.s32.totalorder %s20, 1
      %p139 = por %p137, %p138
      %p141 = scmp.ne.s32.totalorder %s126, %s140
      %p142 = scmp.eq.s32.totalorder %s20, 0
      %p143 = por %p141, %p142
      %s144 = smul.u32 %s21, %s22
      %s145 = smul.u32 %s33, %s29
      %s146 = ssub.s32 %s144, %s145
      %p147 = scmp.eq.s32.totalorder %s146, 0
      %s149 = sadd.s32 %s148, 1
      %s150 = scalar_select %p147, %s148, %s149
      %p153 = pneg %p147
      %p154 = scmp.eq.s32.totalorder %s14, 1
      %p155 = por %p153, %p154
      %p156 = scmp.ne.s32.totalorder %s148, %s151
      %p157 = scmp.eq.s32.totalorder %s14, 0
      %p158 = por %p156, %p157
      %p159 = scmp.ne.s32.totalorder %s148, %s151
      %p160 = scmp.eq.s32.totalorder %s19, 1
      %p161 = por %p159, %p160
      %p162 = scmp.ne.s32.totalorder %s151, %s152
      %p163 = scmp.eq.s32.totalorder %s19, 0
      %p164 = por %p162, %p163
      %p165 = scmp.ne.s32.totalorder %s151, %s152
      %p166 = scmp.eq.s32.totalorder %s20, 1
      %p167 = por %p165, %p166
      %p169 = scmp.ne.s32.totalorder %s152, %s168
      %p170 = scmp.eq.s32.totalorder %s20, 0
      %p171 = por %p169, %p170
      %p172 = scmp.le.s32.totalorder 1, %s14
      %p173 = scmp.lt.s32.totalorder %s14, 3
      %p174 = pnand %p172, %p173
      %p175 = pneg %p174
      // Predicated region
      $region9: #{tpu_custom_call.1} parent=5 // pred_check
        _
      $region10: #{tpu_custom_call.1} parent=5 // pred_check_branch
        %177 = sbr.rel (%p174) target = $region12
      $region11: #{tpu_custom_call.1} parent=5 // pred_region
        %s178 = ssub.s32 %s14, 1
        // Predicated region
        $region13: #{tpu_custom_call.1} parent=11 // pred_check
          %p179 = pneg %p52
        $region14: #{tpu_custom_call.1} parent=11 // pred_check_branch
          %181 = sbr.rel (%p179) target = $region16
        $region15: #{tpu_custom_call.1} parent=11 // pred_region
          %s182 = smul.u32 4, %s24
          %p183 = scmp.lt.s32.totalorder %s182, 3
          %s184 = scalar_select %p183, %s182, 3
          %s185 = smul.addr %s184, 4
          %s186 = scalar_lea.vmem %s0, %s185
          %s187 = smul.u32 4, %s24
        $region16: #{tpu_custom_call.1} parent=11 // pred_fallthru
          _
        // Predicated region
        $region17: #{tpu_custom_call.1} parent=11 // pred_check
          %p188 = pneg %p73
        $region18: #{tpu_custom_call.1} parent=11 // pred_check_branch
          %190 = sbr.rel (%p188) target = $region20
        $region19: #{tpu_custom_call.1} parent=11 // pred_region
          _
        $region20: #{tpu_custom_call.1} parent=11 // pred_fallthru
          _
        // Predicated region
        $region21: #{tpu_custom_call.1} parent=11 // pred_check
          %p191 = pneg %p94
        $region22: #{tpu_custom_call.1} parent=11 // pred_check_branch
          %193 = sbr.rel (%p191) target = $region24
        $region23: #{tpu_custom_call.1} parent=11 // pred_region
          _
        $region24: #{tpu_custom_call.1} parent=11 // pred_fallthru
          _
        // Predicated region
        $region25: #{tpu_custom_call.1} parent=11 // pred_check
          %p194 = pneg %p115
        $region26: #{tpu_custom_call.1} parent=11 // pred_check_branch
          %196 = sbr.rel (%p194) target = $region28
        $region27: #{tpu_custom_call.1} parent=11 // pred_region
          _
        $region28: #{tpu_custom_call.1} parent=11 // pred_fallthru
          _
        // Predicated region
        $region29: #{tpu_custom_call.1} parent=11 // pred_check
          %p197 = pneg %p136
        $region30: #{tpu_custom_call.1} parent=11 // pred_check_branch
          %199 = sbr.rel (%p197) target = $region32
        $region31: #{tpu_custom_call.1} parent=11 // pred_region
          _
        $region32: #{tpu_custom_call.1} parent=11 // pred_fallthru
          _
      $region12: #{tpu_custom_call.1} parent=5 // pred_fallthru
        _
      %p200 = scmp.lt.s32.totalorder %s14, 2
      // Predicated region
      $region33: #{tpu_custom_call.1} parent=5 // pred_check
        %p201 = pneg %p200
      $region34: #{tpu_custom_call.1} parent=5 // pred_check_branch
        %203 = sbr.rel (%p201) target = $region36
      $region35: #{tpu_custom_call.1} parent=5 // pred_region
        _
      $region36: #{tpu_custom_call.1} parent=5 // pred_fallthru
        _
      %p204 = scmp.le.s32.totalorder 1, %s14
      %p205 = scmp.lt.s32.totalorder %s14, 3
      %p206 = pnand %p204, %p205
      %p207 = pneg %p206
      // Predicated region
      $region37: #{tpu_custom_call.1} parent=5 // pred_check
        _
      $region38: #{tpu_custom_call.1} parent=5 // pred_check_branch
        %209 = sbr.rel (%p206) target = $region40
      $region39: #{tpu_custom_call.1} parent=5 // pred_region
        %s210 = ssub.s32 %s14, 1
        %s211 = smul.u32 4, %s24
        %p212 = scmp.lt.s32.totalorder %s211, 3
        %s213 = scalar_select %p212, %s211, 3
        %s214 = smul.addr %s213, 4
        %s215 = scalar_lea.vmem %s0, %s214
        %p216 = pneg %p52
        %p217 = pneg %p49
        %p218 = pneg %p73
        %p219 = pneg %p70
        %p220 = pneg %p94
        %p221 = pneg %p91
        %p222 = pneg %p115
        %p223 = pneg %p112
        %p224 = pneg %p136
        %p225 = pneg %p133
        %p226 = pneg %p164
        %p227 = pneg %p161
        %s228 = sand.u32 %s151, 1
        %s229 = scalar_lea.sflag [#allocation7], %s228
        %s230 = sand.u32 %s151, 1
        %s231 = smul.addr %s230, 128
        %s232 = scalar_lea.vmem [#allocation6], %s231
        %s233 = smul.u32 4, %s24
        %p234 = scmp.lt.s32.totalorder %s233, 3
        %s235 = scalar_select %p234, %s233, 3
        %s236 = smul.addr %s235, 4
        %s237 = scalar_lea.vmem %s0, %s236
        %s238 = smul.u32 4, %s24
        %s239 = smul.u32 %s23, %s24
        %s240 = smul.u32 4, %s239
        %v241 = vld [vmem:[%s1] sm:$0xff]
        %v242 = vld [vmem:[%s1 + $0x8] sm:$0xff]
        %v243 = vld [vmem:[%s1 + $0x10] sm:$0xff]
        %v244 = vld [vmem:[%s1 + $0x18] sm:$0xff]
        %v245 = vld [vmem:[%s237] sm:$0xff]
        %v246 = vld [vmem:[%s237 + $0x8] sm:$0xff]
        %v249 = vcombine.high %v245, %v245
        %v250 = vcombine.high %v246, %v246
        %vm251 = vcmask 31744
        %v253 = vsel %vm251, %v241, 0
        %v256 = vsel %vm251, %v242, 0
        %v259 = vsel %vm251, %v243, 0
        %v262 = vsel %vm251, %v244, 0
        %vm264 = vcmask 1043456
        %v265 = vsel %vm264, %v245, 0
        %v267 = vsel %vm264, %v249, 0
        %v269 = vsel %vm264, %v246, 0
        %v271 = vsel %vm264, %v250, 0
        %273 = vmatprep.subr.mxu0 %v267
        %274 = vmatpush1.msra.mxu0 %v265
        %275 = vmatprep.subr.mxu0 0.0
        %276 = vmatpush1.msra.mxu0 0.0
        %277 = vmatprep.subr.mxu0 0.0
        %278 = vmatpush1.msra.mxu0 0.0
        %279 = vmatprep.subr.mxu0 0.0
        %280 = vmatpush1.msra.mxu0 0.0
        %281 = vmatprep.subr.mxu0 0.0
        %282 = vmatpush1.msra.mxu0 0.0
        %283 = vmatprep.subr.mxu0 0.0
        %284 = vmatpush1.msra.mxu0 0.0
        %285 = vmatprep.subr.mxu0 0.0
        %286 = vmatpush1.msra.mxu0 0.0
        %287 = vmatprep.subr.mxu0 0.0
        %288 = vmatpush1.msra.mxu0 0.0
        %289 = vmatprep.subr.mxu0 0.0
        %290 = vmatpush1.msra.mxu0 0.0
        %291 = vmatprep.subr.mxu0 0.0
        %292 = vmatpush1.msra.mxu0 0.0
        %293 = vmatprep.subr.mxu0 0.0
        %294 = vmatpush1.msra.mxu0 0.0
        %295 = vmatprep.subr.mxu0 0.0
        %296 = vmatpush1.msra.mxu0 0.0
        %297 = vmatprep.subr.mxu0 0.0
        %298 = vmatpush1.msra.mxu0 0.0
        %299 = vmatprep.subr.mxu0 0.0
        %300 = vmatpush1.msra.mxu0 0.0
        %301 = vmatprep.subr.mxu0 0.0
        %302 = vmatpush1.msra.mxu0 0.0
        %303 = vmatprep.subr.mxu0 0.0
        %304 = vmatpush1.msra.mxu0 0.0
        %305 = vmatprep.subr.mxu0 0.0
        %306 = vmatpush1.msra.mxu0 0.0
        %307 = vmatprep.subr.mxu0 0.0
        %308 = vmatpush1.msra.mxu0 0.0
        %309 = vmatprep.subr.mxu0 0.0
        %310 = vmatpush1.msra.mxu0 0.0
        %311 = vmatprep.subr.mxu0 0.0
        %312 = vmatpush1.msra.mxu0 0.0
        %313 = vmatprep.subr.mxu0 0.0
        %314 = vmatpush1.msra.mxu0 0.0
        %315 = vmatprep.subr.mxu0 0.0
        %316 = vmatpush1.msra.mxu0 0.0
        %317 = vmatprep.subr.mxu0 0.0
        %318 = vmatpush1.msra.mxu0 0.0
        %319 = vmatprep.subr.mxu0 0.0
        %320 = vmatpush1.msra.mxu0 0.0
        %321 = vmatprep.subr.mxu0 0.0
        %322 = vmatpush1.msra.mxu0 0.0
        %323 = vmatprep.subr.mxu0 0.0
        %324 = vmatpush1.msra.mxu0 0.0
        %325 = vmatprep.subr.mxu0 0.0
        %326 = vmatpush1.msra.mxu0 0.0
        %327 = vmatprep.subr.mxu0 0.0
        %328 = vmatpush1.msra.mxu0 0.0
        %329 = vmatprep.subr.mxu0 0.0
        %330 = vmatpush1.msra.mxu0 0.0
        %331 = vmatprep.subr.mxu0 0.0
        %332 = vmatpush1.msra.mxu0 0.0
        %333 = vmatprep.subr.mxu0 0.0
        %334 = vmatpush1.msra.mxu0 0.0
        %335 = vmatprep.subr.mxu0 0.0
        %336 = vmatpush1.msra.mxu0 0.0
        %337 = vmatprep.mubr.f32.mxu0 0.0
        %338 = vmatmul.mubr.f32.gmra.mrb[0].mxu0 %v253
        %v339 = vpop.f32.mrb[0].mxu0
        %v340 = vadd.f32 0.0, %v339
        %v341 = vpop.f32.mrb[0].mxu0
        %v342 = vadd.f32 0.0, %v341
        %343 = vmatprep.mubr.f32.mxu0 0.0
        %344 = vmatmul.mubr.f32.gmra.mrb[0].mxu0 %v256
        %v345 = vpop.f32.mrb[0].mxu0
        %v346 = vadd.f32 0.0, %v345
        %v347 = vpop.f32.mrb[0].mxu0
        %v348 = vadd.f32 0.0, %v347
        %349 = vmatprep.mubr.f32.mxu0 0.0
        %350 = vmatmul.mubr.f32.gmra.mrb[0].mxu0 %v259
        %v351 = vpop.f32.mrb[0].mxu0
        %v352 = vadd.f32 0.0, %v351
        %v353 = vpop.f32.mrb[0].mxu0
        %v354 = vadd.f32 0.0, %v353
        %355 = vmatprep.mubr.f32.mxu0 0.0
        %356 = vmatmul.mubr.f32.gmra.mrb[0].mxu0 %v262
        %v357 = vpop.f32.mrb[0].mxu0
        %v358 = vadd.f32 0.0, %v357
        %v359 = vpop.f32.mrb[0].mxu0
        %v360 = vadd.f32 0.0, %v359
        %361 = vdwg.mxu0
        %362 = vmatprep.subr.mxu0 %v271
        %363 = vmatpush1.msra.mxu0 %v269
        %364 = vmatprep.subr.mxu0 0.0
        %365 = vmatpush1.msra.mxu0 0.0
        %366 = vmatprep.subr.mxu0 0.0
        %367 = vmatpush1.msra.mxu0 0.0
        %368 = vmatprep.subr.mxu0 0.0
        %369 = vmatpush1.msra.mxu0 0.0
        %370 = vmatprep.subr.mxu0 0.0
        %371 = vmatpush1.msra.mxu0 0.0
        %372 = vmatprep.subr.mxu0 0.0
        %373 = vmatpush1.msra.mxu0 0.0
        %374 = vmatprep.subr.mxu0 0.0
        %375 = vmatpush1.msra.mxu0 0.0
        %376 = vmatprep.subr.mxu0 0.0
        %377 = vmatpush1.msra.mxu0 0.0
        %378 = vmatprep.subr.mxu0 0.0
        %379 = vmatpush1.msra.mxu0 0.0
        %380 = vmatprep.subr.mxu0 0.0
        %381 = vmatpush1.msra.mxu0 0.0
        %382 = vmatprep.subr.mxu0 0.0
        %383 = vmatpush1.msra.mxu0 0.0
        %384 = vmatprep.subr.mxu0 0.0
        %385 = vmatpush1.msra.mxu0 0.0
        %386 = vmatprep.subr.mxu0 0.0
        %387 = vmatpush1.msra.mxu0 0.0
        %388 = vmatprep.subr.mxu0 0.0
        %389 = vmatpush1.msra.mxu0 0.0
        %390 = vmatprep.subr.mxu0 0.0
        %391 = vmatpush1.msra.mxu0 0.0
        %392 = vmatprep.subr.mxu0 0.0
        %393 = vmatpush1.msra.mxu0 0.0
        %394 = vmatprep.subr.mxu0 0.0
        %395 = vmatpush1.msra.mxu0 0.0
        %396 = vmatprep.subr.mxu0 0.0
        %397 = vmatpush1.msra.mxu0 0.0
        %398 = vmatprep.subr.mxu0 0.0
        %399 = vmatpush1.msra.mxu0 0.0
        %400 = vmatprep.subr.mxu0 0.0
        %401 = vmatpush1.msra.mxu0 0.0
        %402 = vmatprep.subr.mxu0 0.0
        %403 = vmatpush1.msra.mxu0 0.0
        %404 = vmatprep.subr.mxu0 0.0
        %405 = vmatpush1.msra.mxu0 0.0
        %406 = vmatprep.subr.mxu0 0.0
        %407 = vmatpush1.msra.mxu0 0.0
        %408 = vmatprep.subr.mxu0 0.0
        %409 = vmatpush1.msra.mxu0 0.0
        %410 = vmatprep.subr.mxu0 0.0
        %411 = vmatpush1.msra.mxu0 0.0
        %412 = vmatprep.subr.mxu0 0.0
        %413 = vmatpush1.msra.mxu0 0.0
        %414 = vmatprep.subr.mxu0 0.0
        %415 = vmatpush1.msra.mxu0 0.0
        %416 = vmatprep.subr.mxu0 0.0
        %417 = vmatpush1.msra.mxu0 0.0
        %418 = vmatprep.subr.mxu0 0.0
        %419 = vmatpush1.msra.mxu0 0.0
        %420 = vmatprep.subr.mxu0 0.0
        %421 = vmatpush1.msra.mxu0 0.0
        %422 = vmatprep.subr.mxu0 0.0
        %423 = vmatpush1.msra.mxu0 0.0
        %424 = vmatprep.subr.mxu0 0.0
        %425 = vmatpush1.msra.mxu0 0.0
        %426 = vmatprep.mubr.f32.mxu0 0.0
        %427 = vmatmul.mubr.f32.gmra.mrb[0].mxu0 %v253
        %v428 = vpop.f32.mrb[0].mxu0
        %v429 = vadd.f32 0.0, %v428
        %v430 = vpop.f32.mrb[0].mxu0
        %v431 = vadd.f32 0.0, %v430
        %432 = vmatprep.mubr.f32.mxu0 0.0
        %433 = vmatmul.mubr.f32.gmra.mrb[0].mxu0 %v256
        %v434 = vpop.f32.mrb[0].mxu0
        %v435 = vadd.f32 0.0, %v434
        %v436 = vpop.f32.mrb[0].mxu0
        %v437 = vadd.f32 0.0, %v436
        %438 = vmatprep.mubr.f32.mxu0 0.0
        %439 = vmatmul.mubr.f32.gmra.mrb[0].mxu0 %v259
        %v440 = vpop.f32.mrb[0].mxu0
        %v441 = vadd.f32 0.0, %v440
        %v442 = vpop.f32.mrb[0].mxu0
        %v443 = vadd.f32 0.0, %v442
        %444 = vmatprep.mubr.f32.mxu0 0.0
        %445 = vmatmul.mubr.f32.gmra.mrb[0].mxu0 %v262
        %v446 = vpop.f32.mrb[0].mxu0
        %v447 = vadd.f32 0.0, %v446
        %v448 = vpop.f32.mrb[0].mxu0
        %v449 = vadd.f32 0.0, %v448
        %450 = vdwg.mxu0
        %p451 = scmp.eq.s32.totalorder %s23, 0
        // Predicated region
        $region41: #{tpu_custom_call.1} parent=39 // pred_check
          %p452 = pneg %p451
        $region42: #{tpu_custom_call.1} parent=39 // pred_check_branch
          %454 = sbr.rel (%p452) target = $region44
        $region43: #{tpu_custom_call.1} parent=39 // pred_region
          %p455 = scmp.eq.s32.totalorder %s24, 0
          // Predicated region
          $region45: #{tpu_custom_call.1} parent=43 // pred_check
            %p456 = pneg %p455
          $region46: #{tpu_custom_call.1} parent=43 // pred_check_branch
            %458 = sbr.rel (%p456) target = $region48
          $region47: #{tpu_custom_call.1} parent=43 // pred_region
            %vm459 = vcmask 7168
            %460 = vst.msk [vmem:[#allocation2] sm:$0xff] %vm459, 0.0
            %461 = vst.msk [vmem:[#allocation2 + $0x8] sm:$0xff] %vm459, 0.0
            %462 = vst.msk [vmem:[#allocation2 + $0x10] sm:$0xff] %vm459, 0.0
            %463 = vst.msk [vmem:[#allocation2 + $0x18] sm:$0xff] %vm459, 0.0
            %464 = vst.msk [vmem:[#allocation3] sm:$0xff] %vm459, 0.0
            %465 = vst.msk [vmem:[#allocation3 + $0x8] sm:$0xff] %vm459, 0.0
            %466 = vst.msk [vmem:[#allocation3 + $0x10] sm:$0xff] %vm459, 0.0
            %467 = vst.msk [vmem:[#allocation3 + $0x18] sm:$0xff] %vm459, 0.0
          $region48: #{tpu_custom_call.1} parent=43 // pred_fallthru
            _
          %v468 = vld [vmem:[%s2] sm:$0xff]
          %v469 = vld [vmem:[%s2 + $0x8] sm:$0xff]
          %v470 = vld [vmem:[%s2 + $0x10] sm:$0xff]
          %v471 = vld [vmem:[%s2 + $0x18] sm:$0xff]
          %vm472 = vcmask 261120
          %v474 = vsel %vm472, %v468, 0
          %v477 = vsel %vm472, %v469, 0
          %v480 = vsel %vm472, %v470, 0
          %v483 = vsel %vm472, %v471, 0
          %485 = vmatprep.subr.mxu0 %v342
          %486 = vmatpush1.msra.mxu0 %v340
          %487 = vmatprep.subr.mxu0 %v348
          %488 = vmatpush1.msra.mxu0 %v346
          %489 = vmatprep.subr.mxu0 %v354
          %490 = vmatpush1.msra.mxu0 %v352
          %491 = vmatprep.subr.mxu0 %v360
          %492 = vmatpush1.msra.mxu0 %v358
          %493 = vmatprep.subr.mxu0 0.0
          %494 = vmatpush1.msra.mxu0 0.0
          %495 = vmatprep.subr.mxu0 0.0
          %496 = vmatpush1.msra.mxu0 0.0
          %497 = vmatprep.subr.mxu0 0.0
          %498 = vmatpush1.msra.mxu0 0.0
          %499 = vmatprep.subr.mxu0 0.0
          %500 = vmatpush1.msra.mxu0 0.0
          %501 = vmatprep.subr.mxu0 0.0
          %502 = vmatpush1.msra.mxu0 0.0
          %503 = vmatprep.subr.mxu0 0.0
          %504 = vmatpush1.msra.mxu0 0.0
          %505 = vmatprep.subr.mxu0 0.0
          %506 = vmatpush1.msra.mxu0 0.0
          %507 = vmatprep.subr.mxu0 0.0
          %508 = vmatpush1.msra.mxu0 0.0
          %509 = vmatprep.subr.mxu0 0.0
          %510 = vmatpush1.msra.mxu0 0.0
          %511 = vmatprep.subr.mxu0 0.0
          %512 = vmatpush1.msra.mxu0 0.0
          %513 = vmatprep.subr.mxu0 0.0
          %514 = vmatpush1.msra.mxu0 0.0
          %515 = vmatprep.subr.mxu0 0.0
          %516 = vmatpush1.msra.mxu0 0.0
          %517 = vmatprep.subr.mxu0 0.0
          %518 = vmatpush1.msra.mxu0 0.0
          %519 = vmatprep.subr.mxu0 0.0
          %520 = vmatpush1.msra.mxu0 0.0
          %521 = vmatprep.subr.mxu0 0.0
          %522 = vmatpush1.msra.mxu0 0.0
          %523 = vmatprep.subr.mxu0 0.0
          %524 = vmatpush1.msra.mxu0 0.0
          %525 = vmatprep.subr.mxu0 0.0
          %526 = vmatpush1.msra.mxu0 0.0
          %527 = vmatprep.subr.mxu0 0.0
          %528 = vmatpush1.msra.mxu0 0.0
          %529 = vmatprep.subr.mxu0 0.0
          %530 = vmatpush1.msra.mxu0 0.0
          %531 = vmatprep.subr.mxu0 0.0
          %532 = vmatpush1.msra.mxu0 0.0
          %533 = vmatprep.subr.mxu0 0.0
          %534 = vmatpush1.msra.mxu0 0.0
          %535 = vmatprep.subr.mxu0 0.0
          %536 = vmatpush1.msra.mxu0 0.0
          %537 = vmatprep.subr.mxu0 0.0
          %538 = vmatpush1.msra.mxu0 0.0
          %539 = vmatprep.subr.mxu0 0.0
          %540 = vmatpush1.msra.mxu0 0.0
          %541 = vmatprep.subr.mxu0 0.0
          %542 = vmatpush1.msra.mxu0 0.0
          %543 = vmatprep.subr.mxu0 0.0
          %544 = vmatpush1.msra.mxu0 0.0
          %545 = vmatprep.subr.mxu0 0.0
          %546 = vmatpush1.msra.mxu0 0.0
          %547 = vmatprep.subr.mxu0 0.0
          %548 = vmatpush1.msra.mxu0 0.0
          %549 = vmatprep.mubr.f32.mxu0 0.0
          %550 = vmatmul.mubr.f32.gmra.mrb[0].mxu0 %v474
          %v551 = vpop.f32.mrb[0].mxu0
          %v552 = vadd.f32 0.0, %v551
          %v553 = vpop.f32.mrb[0].mxu0
          %v554 = vadd.f32 0.0, %v553
          %555 = vmatprep.mubr.f32.mxu0 0.0
          %556 = vmatmul.mubr.f32.gmra.mrb[0].mxu0 %v477
          %v557 = vpop.f32.mrb[0].mxu0
          %v558 = vadd.f32 0.0, %v557
          %v559 = vpop.f32.mrb[0].mxu0
          %v560 = vadd.f32 0.0, %v559
          %561 = vmatprep.mubr.f32.mxu0 0.0
          %562 = vmatmul.mubr.f32.gmra.mrb[0].mxu0 %v480
          %v563 = vpop.f32.mrb[0].mxu0
          %v564 = vadd.f32 0.0, %v563
          %v565 = vpop.f32.mrb[0].mxu0
          %v566 = vadd.f32 0.0, %v565
          %567 = vmatprep.mubr.f32.mxu0 0.0
          %568 = vmatmul.mubr.f32.gmra.mrb[0].mxu0 %v483
          %v569 = vpop.f32.mrb[0].mxu0
          %v570 = vadd.f32 0.0, %v569
          %v571 = vpop.f32.mrb[0].mxu0
          %v572 = vadd.f32 0.0, %v571
          %573 = vdwg.mxu0
          %574 = vmatprep.subr.mxu0 %v431
          %575 = vmatpush1.msra.mxu0 %v429
          %576 = vmatprep.subr.mxu0 %v437
          %577 = vmatpush1.msra.mxu0 %v435
          %578 = vmatprep.subr.mxu0 %v443
          %579 = vmatpush1.msra.mxu0 %v441
          %580 = vmatprep.subr.mxu0 %v449
          %581 = vmatpush1.msra.mxu0 %v447
          %582 = vmatprep.subr.mxu0 0.0
          %583 = vmatpush1.msra.mxu0 0.0
          %584 = vmatprep.subr.mxu0 0.0
          %585 = vmatpush1.msra.mxu0 0.0
          %586 = vmatprep.subr.mxu0 0.0
          %587 = vmatpush1.msra.mxu0 0.0
          %588 = vmatprep.subr.mxu0 0.0
          %589 = vmatpush1.msra.mxu0 0.0
          %590 = vmatprep.subr.mxu0 0.0
          %591 = vmatpush1.msra.mxu0 0.0
          %592 = vmatprep.subr.mxu0 0.0
          %593 = vmatpush1.msra.mxu0 0.0
          %594 = vmatprep.subr.mxu0 0.0
          %595 = vmatpush1.msra.mxu0 0.0
          %596 = vmatprep.subr.mxu0 0.0
          %597 = vmatpush1.msra.mxu0 0.0
          %598 = vmatprep.subr.mxu0 0.0
          %599 = vmatpush1.msra.mxu0 0.0
          %600 = vmatprep.subr.mxu0 0.0
          %601 = vmatpush1.msra.mxu0 0.0
          %602 = vmatprep.subr.mxu0 0.0
          %603 = vmatpush1.msra.mxu0 0.0
          %604 = vmatprep.subr.mxu0 0.0
          %605 = vmatpush1.msra.mxu0 0.0
          %606 = vmatprep.subr.mxu0 0.0
          %607 = vmatpush1.msra.mxu0 0.0
          %608 = vmatprep.subr.mxu0 0.0
          %609 = vmatpush1.msra.mxu0 0.0
          %610 = vmatprep.subr.mxu0 0.0
          %611 = vmatpush1.msra.mxu0 0.0
          %612 = vmatprep.subr.mxu0 0.0
          %613 = vmatpush1.msra.mxu0 0.0
          %614 = vmatprep.subr.mxu0 0.0
          %615 = vmatpush1.msra.mxu0 0.0
          %616 = vmatprep.subr.mxu0 0.0
          %617 = vmatpush1.msra.mxu0 0.0
          %618 = vmatprep.subr.mxu0 0.0
          %619 = vmatpush1.msra.mxu0 0.0
          %620 = vmatprep.subr.mxu0 0.0
          %621 = vmatpush1.msra.mxu0 0.0
          %622 = vmatprep.subr.mxu0 0.0
          %623 = vmatpush1.msra.mxu0 0.0
          %624 = vmatprep.subr.mxu0 0.0
          %625 = vmatpush1.msra.mxu0 0.0
          %626 = vmatprep.subr.mxu0 0.0
          %627 = vmatpush1.msra.mxu0 0.0
          %628 = vmatprep.subr.mxu0 0.0
          %629 = vmatpush1.msra.mxu0 0.0
          %630 = vmatprep.subr.mxu0 0.0
          %631 = vmatpush1.msra.mxu0 0.0
          %632 = vmatprep.subr.mxu0 0.0
          %633 = vmatpush1.msra.mxu0 0.0
          %634 = vmatprep.subr.mxu0 0.0
          %635 = vmatpush1.msra.mxu0 0.0
          %636 = vmatprep.subr.mxu0 0.0
          %637 = vmatpush1.msra.mxu0 0.0
          %638 = vmatprep.mubr.f32.mxu0 0.0
          %639 = vmatmul.mubr.f32.gmra.mrb[0].mxu0 %v474
          %v640 = vpop.f32.mrb[0].mxu0
          %v641 = vadd.f32 0.0, %v640
          %v642 = vpop.f32.mrb[0].mxu0
          %v643 = vadd.f32 0.0, %v642
          %644 = vmatprep.mubr.f32.mxu0 0.0
          %645 = vmatmul.mubr.f32.gmra.mrb[0].mxu0 %v477
          %v646 = vpop.f32.mrb[0].mxu0
          %v647 = vadd.f32 0.0, %v646
          %v648 = vpop.f32.mrb[0].mxu0
          %v649 = vadd.f32 0.0, %v648
          %650 = vmatprep.mubr.f32.mxu0 0.0
          %651 = vmatmul.mubr.f32.gmra.mrb[0].mxu0 %v480
          %v652 = vpop.f32.mrb[0].mxu0
          %v653 = vadd.f32 0.0, %v652
          %v654 = vpop.f32.mrb[0].mxu0
          %v655 = vadd.f32 0.0, %v654
          %656 = vmatprep.mubr.f32.mxu0 0.0
          %657 = vmatmul.mubr.f32.gmra.mrb[0].mxu0 %v483
          %v658 = vpop.f32.mrb[0].mxu0
          %v659 = vadd.f32 0.0, %v658
          %v660 = vpop.f32.mrb[0].mxu0
          %v661 = vadd.f32 0.0, %v660
          %662 = vdwg.mxu0
          %v663 = vmul.f32 %v340, %v340
          %v664 = vmul.f32 %v342, %v342
          %v665 = vmul.f32 %v429, %v429
          %v666 = vmul.f32 %v431, %v431
          %v667 = vmul.f32 %v346, %v346
          %v668 = vmul.f32 %v348, %v348
          %v669 = vmul.f32 %v435, %v435
          %v670 = vmul.f32 %v437, %v437
          %v671 = vmul.f32 %v352, %v352
          %v672 = vmul.f32 %v354, %v354
          %v673 = vmul.f32 %v441, %v441
          %v674 = vmul.f32 %v443, %v443
          %v675 = vmul.f32 %v358, %v358
          %v676 = vmul.f32 %v360, %v360
          %v677 = vmul.f32 %v447, %v447
          %v678 = vmul.f32 %v449, %v449
          %679 = vmatprep.subr.mxu0 %v664
          %680 = vmatpush1.msra.mxu0 %v663
          %681 = vmatprep.subr.mxu0 %v668
          %682 = vmatpush1.msra.mxu0 %v667
          %683 = vmatprep.subr.mxu0 %v672
          %684 = vmatpush1.msra.mxu0 %v671
          %685 = vmatprep.subr.mxu0 %v676
          %686 = vmatpush1.msra.mxu0 %v675
          %687 = vmatprep.subr.mxu0 0.0
          %688 = vmatpush1.msra.mxu0 0.0
          %689 = vmatprep.subr.mxu0 0.0
          %690 = vmatpush1.msra.mxu0 0.0
          %691 = vmatprep.subr.mxu0 0.0
          %692 = vmatpush1.msra.mxu0 0.0
          %693 = vmatprep.subr.mxu0 0.0
          %694 = vmatpush1.msra.mxu0 0.0
          %695 = vmatprep.subr.mxu0 0.0
          %696 = vmatpush1.msra.mxu0 0.0
          %697 = vmatprep.subr.mxu0 0.0
          %698 = vmatpush1.msra.mxu0 0.0
          %699 = vmatprep.subr.mxu0 0.0
          %700 = vmatpush1.msra.mxu0 0.0
          %701 = vmatprep.subr.mxu0 0.0
          %702 = vmatpush1.msra.mxu0 0.0
          %703 = vmatprep.subr.mxu0 0.0
          %704 = vmatpush1.msra.mxu0 0.0
          %705 = vmatprep.subr.mxu0 0.0
          %706 = vmatpush1.msra.mxu0 0.0
          %707 = vmatprep.subr.mxu0 0.0
          %708 = vmatpush1.msra.mxu0 0.0
          %709 = vmatprep.subr.mxu0 0.0
          %710 = vmatpush1.msra.mxu0 0.0
          %711 = vmatprep.subr.mxu0 0.0
          %712 = vmatpush1.msra.mxu0 0.0
          %713 = vmatprep.subr.mxu0 0.0
          %714 = vmatpush1.msra.mxu0 0.0
          %715 = vmatprep.subr.mxu0 0.0
          %716 = vmatpush1.msra.mxu0 0.0
          %717 = vmatprep.subr.mxu0 0.0
          %718 = vmatpush1.msra.mxu0 0.0
          %719 = vmatprep.subr.mxu0 0.0
          %720 = vmatpush1.msra.mxu0 0.0
          %721 = vmatprep.subr.mxu0 0.0
          %722 = vmatpush1.msra.mxu0 0.0
          %723 = vmatprep.subr.mxu0 0.0
          %724 = vmatpush1.msra.mxu0 0.0
          %725 = vmatprep.subr.mxu0 0.0
          %726 = vmatpush1.msra.mxu0 0.0
          %727 = vmatprep.subr.mxu0 0.0
          %728 = vmatpush1.msra.mxu0 0.0
          %729 = vmatprep.subr.mxu0 0.0
          %730 = vmatpush1.msra.mxu0 0.0
          %731 = vmatprep.subr.mxu0 0.0
          %732 = vmatpush1.msra.mxu0 0.0
          %733 = vmatprep.subr.mxu0 0.0
          %734 = vmatpush1.msra.mxu0 0.0
          %735 = vmatprep.subr.mxu0 0.0
          %736 = vmatpush1.msra.mxu0 0.0
          %737 = vmatprep.subr.mxu0 0.0
          %738 = vmatpush1.msra.mxu0 0.0
          %739 = vmatprep.subr.mxu0 0.0
          %740 = vmatpush1.msra.mxu0 0.0
          %741 = vmatprep.subr.mxu0 0.0
          %742 = vmatpush1.msra.mxu0 0.0
          %743 = vmatprep.mubr.f32.mxu0 0.0
          %744 = vmatmul.mubr.f32.gmra.mrb[0].mxu0 %v474
          %v745 = vpop.f32.mrb[0].mxu0
          %v746 = vadd.f32 0.0, %v745
          %v747 = vpop.f32.mrb[0].mxu0
          %v748 = vadd.f32 0.0, %v747
          %749 = vmatprep.mubr.f32.mxu0 0.0
          %750 = vmatmul.mubr.f32.gmra.mrb[0].mxu0 %v477
          %v751 = vpop.f32.mrb[0].mxu0
          %v752 = vadd.f32 0.0, %v751
          %v753 = vpop.f32.mrb[0].mxu0
          %v754 = vadd.f32 0.0, %v753
          %755 = vmatprep.mubr.f32.mxu0 0.0
          %756 = vmatmul.mubr.f32.gmra.mrb[0].mxu0 %v480
          %v757 = vpop.f32.mrb[0].mxu0
          %v758 = vadd.f32 0.0, %v757
          %v759 = vpop.f32.mrb[0].mxu0
          %v760 = vadd.f32 0.0, %v759
          %761 = vmatprep.mubr.f32.mxu0 0.0
          %762 = vmatmul.mubr.f32.gmra.mrb[0].mxu0 %v483
          %v763 = vpop.f32.mrb[0].mxu0
          %v764 = vadd.f32 0.0, %v763
          %v765 = vpop.f32.mrb[0].mxu0
          %v766 = vadd.f32 0.0, %v765
          %767 = vdwg.mxu0
          %768 = vmatprep.subr.mxu0 %v666
          %769 = vmatpush1.msra.mxu0 %v665
          %770 = vmatprep.subr.mxu0 %v670
          %771 = vmatpush1.msra.mxu0 %v669
          %772 = vmatprep.subr.mxu0 %v674
          %773 = vmatpush1.msra.mxu0 %v673
          %774 = vmatprep.subr.mxu0 %v678
          %775 = vmatpush1.msra.mxu0 %v677
          %776 = vmatprep.subr.mxu0 0.0
          %777 = vmatpush1.msra.mxu0 0.0
          %778 = vmatprep.subr.mxu0 0.0
          %779 = vmatpush1.msra.mxu0 0.0
          %780 = vmatprep.subr.mxu0 0.0
          %781 = vmatpush1.msra.mxu0 0.0
          %782 = vmatprep.subr.mxu0 0.0
          %783 = vmatpush1.msra.mxu0 0.0
          %784 = vmatprep.subr.mxu0 0.0
          %785 = vmatpush1.msra.mxu0 0.0
          %786 = vmatprep.subr.mxu0 0.0
          %787 = vmatpush1.msra.mxu0 0.0
          %788 = vmatprep.subr.mxu0 0.0
          %789 = vmatpush1.msra.mxu0 0.0
          %790 = vmatprep.subr.mxu0 0.0
          %791 = vmatpush1.msra.mxu0 0.0
          %792 = vmatprep.subr.mxu0 0.0
          %793 = vmatpush1.msra.mxu0 0.0
          %794 = vmatprep.subr.mxu0 0.0
          %795 = vmatpush1.msra.mxu0 0.0
          %796 = vmatprep.subr.mxu0 0.0
          %797 = vmatpush1.msra.mxu0 0.0
          %798 = vmatprep.subr.mxu0 0.0
          %799 = vmatpush1.msra.mxu0 0.0
          %800 = vmatprep.subr.mxu0 0.0
          %801 = vmatpush1.msra.mxu0 0.0
          %802 = vmatprep.subr.mxu0 0.0
          %803 = vmatpush1.msra.mxu0 0.0
          %804 = vmatprep.subr.mxu0 0.0
          %805 = vmatpush1.msra.mxu0 0.0
          %806 = vmatprep.subr.mxu0 0.0
          %807 = vmatpush1.msra.mxu0 0.0
          %808 = vmatprep.subr.mxu0 0.0
          %809 = vmatpush1.msra.mxu0 0.0
          %810 = vmatprep.subr.mxu0 0.0
          %811 = vmatpush1.msra.mxu0 0.0
          %812 = vmatprep.subr.mxu0 0.0
          %813 = vmatpush1.msra.mxu0 0.0
          %814 = vmatprep.subr.mxu0 0.0
          %815 = vmatpush1.msra.mxu0 0.0
          %816 = vmatprep.subr.mxu0 0.0
          %817 = vmatpush1.msra.mxu0 0.0
          %818 = vmatprep.subr.mxu0 0.0
          %819 = vmatpush1.msra.mxu0 0.0
          %820 = vmatprep.subr.mxu0 0.0
          %821 = vmatpush1.msra.mxu0 0.0
          %822 = vmatprep.subr.mxu0 0.0
          %823 = vmatpush1.msra.mxu0 0.0
          %824 = vmatprep.subr.mxu0 0.0
          %825 = vmatpush1.msra.mxu0 0.0
          %826 = vmatprep.subr.mxu0 0.0
          %827 = vmatpush1.msra.mxu0 0.0
          %828 = vmatprep.subr.mxu0 0.0
          %829 = vmatpush1.msra.mxu0 0.0
          %830 = vmatprep.subr.mxu0 0.0
          %831 = vmatpush1.msra.mxu0 0.0
          %832 = vmatprep.mubr.f32.mxu0 0.0
          %833 = vmatmul.mubr.f32.gmra.mrb[0].mxu0 %v474
          %v834 = vpop.f32.mrb[0].mxu0
          %v835 = vadd.f32 0.0, %v834
          %v836 = vpop.f32.mrb[0].mxu0
          %v837 = vadd.f32 0.0, %v836
          %838 = vmatprep.mubr.f32.mxu0 0.0
          %839 = vmatmul.mubr.f32.gmra.mrb[0].mxu0 %v477
          %v840 = vpop.f32.mrb[0].mxu0
          %v841 = vadd.f32 0.0, %v840
          %v842 = vpop.f32.mrb[0].mxu0
          %v843 = vadd.f32 0.0, %v842
          %844 = vmatprep.mubr.f32.mxu0 0.0
          %845 = vmatmul.mubr.f32.gmra.mrb[0].mxu0 %v480
          %v846 = vpop.f32.mrb[0].mxu0
          %v847 = vadd.f32 0.0, %v846
          %v848 = vpop.f32.mrb[0].mxu0
          %v849 = vadd.f32 0.0, %v848
          %850 = vmatprep.mubr.f32.mxu0 0.0
          %851 = vmatmul.mubr.f32.gmra.mrb[0].mxu0 %v483
          %v852 = vpop.f32.mrb[0].mxu0
          %v853 = vadd.f32 0.0, %v852
          %v854 = vpop.f32.mrb[0].mxu0
          %v855 = vadd.f32 0.0, %v854
          %856 = vdwg.mxu0
          %v857 = vld [vmem:[#allocation2] sm:$0xff]
          %v858 = vld [vmem:[#allocation2 + $0x8] sm:$0xff]
          %v859 = vld [vmem:[#allocation2 + $0x10] sm:$0xff]
          %v860 = vld [vmem:[#allocation2 + $0x18] sm:$0xff]
          %v861 = vadd.f32 %v552, %v554
          %v862 = vadd.f32 %v861, %v641
          %v863 = vadd.f32 %v862, %v643
          %864 = vadd.xlane.f32.xlu0 %v863
          %v865 = vpop.xlane.xlu0 %864
          %v866 = vadd.f32 %v558, %v560
          %v867 = vadd.f32 %v866, %v647
          %v868 = vadd.f32 %v867, %v649
          %869 = vadd.xlane.f32.xlu0 %v868
          %v870 = vpop.xlane.xlu0 %869
          %v871 = vadd.f32 %v564, %v566
          %v872 = vadd.f32 %v871, %v653
          %v873 = vadd.f32 %v872, %v655
          %874 = vadd.xlane.f32.xlu0 %v873
          %v875 = vpop.xlane.xlu0 %874
          %v876 = vadd.f32 %v570, %v572
          %v877 = vadd.f32 %v876, %v659
          %v878 = vadd.f32 %v877, %v661
          %879 = vadd.xlane.f32.xlu0 %v878
          %v880 = vpop.xlane.xlu0 %879
          %v881 = vadd.f32 %v857, %v865
          %v882 = vadd.f32 %v858, %v870
          %v883 = vadd.f32 %v859, %v875
          %v884 = vadd.f32 %v860, %v880
          %vm885 = vcmask 7168
          %886 = vst.msk [vmem:[#allocation2] sm:$0xff] %vm885, %v881
          %887 = vst.msk [vmem:[#allocation2 + $0x8] sm:$0xff] %vm885, %v882
          %888 = vst.msk [vmem:[#allocation2 + $0x10] sm:$0xff] %vm885, %v883
          %889 = vst.msk [vmem:[#allocation2 + $0x18] sm:$0xff] %vm885, %v884
          %v890 = vld [vmem:[#allocation3] sm:$0xff]
          %v891 = vld [vmem:[#allocation3 + $0x8] sm:$0xff]
          %v892 = vld [vmem:[#allocation3 + $0x10] sm:$0xff]
          %v893 = vld [vmem:[#allocation3 + $0x18] sm:$0xff]
          %v894 = vadd.f32 %v746, %v748
          %v895 = vadd.f32 %v894, %v835
          %v896 = vadd.f32 %v895, %v837
          %897 = vadd.xlane.f32.xlu0 %v896
          %v898 = vpop.xlane.xlu0 %897
          %v899 = vadd.f32 %v752, %v754
          %v900 = vadd.f32 %v899, %v841
          %v901 = vadd.f32 %v900, %v843
          %902 = vadd.xlane.f32.xlu0 %v901
          %v903 = vpop.xlane.xlu0 %902
          %v904 = vadd.f32 %v758, %v760
          %v905 = vadd.f32 %v904, %v847
          %v906 = vadd.f32 %v905, %v849
          %907 = vadd.xlane.f32.xlu0 %v906
          %v908 = vpop.xlane.xlu0 %907
          %v909 = vadd.f32 %v764, %v766
          %v910 = vadd.f32 %v909, %v853
          %v911 = vadd.f32 %v910, %v855
          %912 = vadd.xlane.f32.xlu0 %v911
          %v913 = vpop.xlane.xlu0 %912
          %v914 = vadd.f32 %v890, %v898
          %v915 = vadd.f32 %v891, %v903
          %v916 = vadd.f32 %v892, %v908
          %v917 = vadd.f32 %v893, %v913
          %918 = vst.msk [vmem:[#allocation3] sm:$0xff] %vm885, %v914
          %919 = vst.msk [vmem:[#allocation3 + $0x8] sm:$0xff] %vm885, %v915
          %920 = vst.msk [vmem:[#allocation3 + $0x10] sm:$0xff] %vm885, %v916
          %921 = vst.msk [vmem:[#allocation3 + $0x18] sm:$0xff] %vm885, %v917
          // Predicated region
          $region49: #{tpu_custom_call.1} parent=43 // pred_check
            %p922 = pneg %p455
          $region50: #{tpu_custom_call.1} parent=43 // pred_check_branch
            %924 = sbr.rel (%p922) target = $region52
          $region51: #{tpu_custom_call.1} parent=43 // pred_region
            %v925 = vld [vmem:[#allocation2] sm:$0xff]
            %v926 = vld [vmem:[#allocation2 + $0x8] sm:$0xff]
            %v927 = vld [vmem:[#allocation2 + $0x10] sm:$0xff]
            %v928 = vld [vmem:[#allocation2 + $0x18] sm:$0xff]
            %v929 = vmul.f32 %v925, 0.00048828125
            %v930 = vmul.f32 %v926, 0.00048828125
            %v931 = vmul.f32 %v927, 0.00048828125
            %v932 = vmul.f32 %v928, 0.00048828125
            %v933 = vld [vmem:[#allocation3] sm:$0xff]
            %v934 = vld [vmem:[#allocation3 + $0x8] sm:$0xff]
            %v935 = vld [vmem:[#allocation3 + $0x10] sm:$0xff]
            %v936 = vld [vmem:[#allocation3 + $0x18] sm:$0xff]
            %v937 = vmul.f32 %v933, 0.00048828125
            %v938 = vmul.f32 %v934, 0.00048828125
            %v939 = vmul.f32 %v935, 0.00048828125
            %v940 = vmul.f32 %v936, 0.00048828125
            %v941 = vmul.f32 %v929, %v929
            %v942 = vmul.f32 %v930, %v930
            %v943 = vmul.f32 %v931, %v931
            %v944 = vmul.f32 %v932, %v932
            %v945 = vsub.f32 %v937, %v941
            %v946 = vsub.f32 %v938, %v942
            %v947 = vsub.f32 %v939, %v943
            %v948 = vsub.f32 %v940, %v944
            %v949 = vadd.f32 %v945, 1e-05
            %v950 = vadd.f32 %v946, 1e-05
            %v951 = vadd.f32 %v947, 1e-05
            %v952 = vadd.f32 %v948, 1e-05
            %v953 = vrsqrt.pop %v949
            %v954 = vrsqrt.pop %v950
            %v955 = vrsqrt.pop %v951
            %v956 = vrsqrt.pop %v952
            %v957 = vld [vmem:[%s3] sm:$0xff]
            %v958 = vld [vmem:[%s3 + $0x8] sm:$0xff]
            %v959 = vld [vmem:[%s3 + $0x10] sm:$0xff]
            %v960 = vld [vmem:[%s3 + $0x18] sm:$0xff]
            %v961 = vmul.f32 %v957, %v953
            %v962 = vmul.f32 %v958, %v954
            %v963 = vmul.f32 %v959, %v955
            %v964 = vmul.f32 %v960, %v956
            %965 = vst.msk [vmem:[#allocation4] sm:$0xff] %vm885, %v961
            %966 = vst.msk [vmem:[#allocation4 + $0x8] sm:$0xff] %vm885, %v962
            %967 = vst.msk [vmem:[#allocation4 + $0x10] sm:$0xff] %vm885, %v963
            %968 = vst.msk [vmem:[#allocation4 + $0x18] sm:$0xff] %vm885, %v964
            %v969 = vld [vmem:[%s4] sm:$0xff]
            %v970 = vld [vmem:[%s4 + $0x8] sm:$0xff]
            %v971 = vld [vmem:[%s4 + $0x10] sm:$0xff]
            %v972 = vld [vmem:[%s4 + $0x18] sm:$0xff]
            %v973 = vmul.f32 %v929, %v961
            %v974 = vmul.f32 %v930, %v962
            %v975 = vmul.f32 %v931, %v963
            %v976 = vmul.f32 %v932, %v964
            %v977 = vsub.f32 %v969, %v973
            %v978 = vsub.f32 %v970, %v974
            %v979 = vsub.f32 %v971, %v975
            %v980 = vsub.f32 %v972, %v976
            %981 = vst.msk [vmem:[#allocation5] sm:$0xff] %vm885, %v977
            %982 = vst.msk [vmem:[#allocation5 + $0x8] sm:$0xff] %vm885, %v978
            %983 = vst.msk [vmem:[#allocation5 + $0x10] sm:$0xff] %vm885, %v979
            %984 = vst.msk [vmem:[#allocation5 + $0x18] sm:$0xff] %vm885, %v980
          $region52: #{tpu_custom_call.1} parent=43 // pred_fallthru
            _
        $region44: #{tpu_custom_call.1} parent=39 // pred_fallthru
          _
        %p985 = scmp.eq.s32.totalorder %s23, 1
        // Predicated region
        $region53: #{tpu_custom_call.1} parent=39 // pred_check
          %p986 = pneg %p985
        $region54: #{tpu_custom_call.1} parent=39 // pred_check_branch
          %988 = sbr.rel (%p986) target = $region56
        $region55: #{tpu_custom_call.1} parent=39 // pred_region
          %v989 = vld [vmem:[#allocation4] sm:$0xff]
          %v990 = vld [vmem:[#allocation4 + $0x8] sm:$0xff]
          %v991 = vld [vmem:[#allocation4 + $0x10] sm:$0xff]
          %v992 = vld [vmem:[#allocation4 + $0x18] sm:$0xff]
          %994 = vset.pattern.permute.xlu0 0
          %995 = vperm.xlu0 %994, %v989
          %v996 = vpop.permute.xlu0 %995
          %999 = vset.pattern.permute.xlu0 0
          %1000 = vperm.xlu0 %999, %v990
          %v1001 = vpop.permute.xlu0 %1000
          %1004 = vset.pattern.permute.xlu0 0
          %1005 = vperm.xlu0 %1004, %v991
          %v1006 = vpop.permute.xlu0 %1005
          %1009 = vset.pattern.permute.xlu0 0
          %1010 = vperm.xlu0 %1009, %v992
          %v1011 = vpop.permute.xlu0 %1010
          %v1013 = vmul.f32 %v340, %v996
          %v1014 = vmul.f32 %v342, %v996
          %v1015 = vmul.f32 %v429, %v996
          %v1016 = vmul.f32 %v431, %v996
          %v1017 = vmul.f32 %v346, %v1001
          %v1018 = vmul.f32 %v348, %v1001
          %v1019 = vmul.f32 %v435, %v1001
          %v1020 = vmul.f32 %v437, %v1001
          %v1021 = vmul.f32 %v352, %v1006
          %v1022 = vmul.f32 %v354, %v1006
          %v1023 = vmul.f32 %v441, %v1006
          %v1024 = vmul.f32 %v443, %v1006
          %v1025 = vmul.f32 %v358, %v1011
          %v1026 = vmul.f32 %v360, %v1011
          %v1027 = vmul.f32 %v447, %v1011
          %v1028 = vmul.f32 %v449, %v1011
          %v1029 = vld [vmem:[#allocation5] sm:$0xff]
          %v1030 = vld [vmem:[#allocation5 + $0x8] sm:$0xff]
          %v1031 = vld [vmem:[#allocation5 + $0x10] sm:$0xff]
          %v1032 = vld [vmem:[#allocation5 + $0x18] sm:$0xff]
          %1034 = vset.pattern.permute.xlu0 0
          %1035 = vperm.xlu0 %1034, %v1029
          %v1036 = vpop.permute.xlu0 %1035
          %1039 = vset.pattern.permute.xlu0 0
          %1040 = vperm.xlu0 %1039, %v1030
          %v1041 = vpop.permute.xlu0 %1040
          %1044 = vset.pattern.permute.xlu0 0
          %1045 = vperm.xlu0 %1044, %v1031
          %v1046 = vpop.permute.xlu0 %1045
          %1049 = vset.pattern.permute.xlu0 0
          %1050 = vperm.xlu0 %1049, %v1032
          %v1051 = vpop.permute.xlu0 %1050
          %v1053 = vadd.f32 %v1013, %v1036
          %v1054 = vadd.f32 %v1014, %v1036
          %v1055 = vadd.f32 %v1015, %v1036
          %v1056 = vadd.f32 %v1016, %v1036
          %v1057 = vadd.f32 %v1017, %v1041
          %v1058 = vadd.f32 %v1018, %v1041
          %v1059 = vadd.f32 %v1019, %v1041
          %v1060 = vadd.f32 %v1020, %v1041
          %v1061 = vadd.f32 %v1021, %v1046
          %v1062 = vadd.f32 %v1022, %v1046
          %v1063 = vadd.f32 %v1023, %v1046
          %v1064 = vadd.f32 %v1024, %v1046
          %v1065 = vadd.f32 %v1025, %v1051
          %v1066 = vadd.f32 %v1026, %v1051
          %v1067 = vadd.f32 %v1027, %v1051
          %v1068 = vadd.f32 %v1028, %v1051
          %v1069 = vmax.f32 %v1053, 0.0
          %v1070 = vmax.f32 %v1054, 0.0
          %v1071 = vmax.f32 %v1055, 0.0
          %v1072 = vmax.f32 %v1056, 0.0
          %v1073 = vmax.f32 %v1057, 0.0
          %v1074 = vmax.f32 %v1058, 0.0
          %v1075 = vmax.f32 %v1059, 0.0
          %v1076 = vmax.f32 %v1060, 0.0
          %v1077 = vmax.f32 %v1061, 0.0
          %v1078 = vmax.f32 %v1062, 0.0
          %v1079 = vmax.f32 %v1063, 0.0
          %v1080 = vmax.f32 %v1064, 0.0
          %v1081 = vmax.f32 %v1065, 0.0
          %v1082 = vmax.f32 %v1066, 0.0
          %v1083 = vmax.f32 %v1067, 0.0
          %v1084 = vmax.f32 %v1068, 0.0
          %1085 = vst [vmem:[%s232] sm:$0xff] %v1069
          %1086 = vst [vmem:[%s232 + $0x8] sm:$0xff] %v1070
          %1087 = vst [vmem:[%s232 + $0x10] sm:$0xff] %v1071
          %1088 = vst [vmem:[%s232 + $0x18] sm:$0xff] %v1072
          %1089 = vst [vmem:[%s232 + $0x20] sm:$0xff] %v1073
          %1090 = vst [vmem:[%s232 + $0x28] sm:$0xff] %v1074
          %1091 = vst [vmem:[%s232 + $0x30] sm:$0xff] %v1075
          %1092 = vst [vmem:[%s232 + $0x38] sm:$0xff] %v1076
          %1093 = vst [vmem:[%s232 + $0x40] sm:$0xff] %v1077
          %1094 = vst [vmem:[%s232 + $0x48] sm:$0xff] %v1078
          %1095 = vst [vmem:[%s232 + $0x50] sm:$0xff] %v1079
          %1096 = vst [vmem:[%s232 + $0x58] sm:$0xff] %v1080
          %1097 = vst [vmem:[%s232 + $0x60] sm:$0xff] %v1081
          %1098 = vst [vmem:[%s232 + $0x68] sm:$0xff] %v1082
          %1099 = vst [vmem:[%s232 + $0x70] sm:$0xff] %v1083
          %1100 = vst [vmem:[%s232 + $0x78] sm:$0xff] %v1084
        $region56: #{tpu_custom_call.1} parent=39 // pred_fallthru
          _
        %s1101 = sand.u32 %s151, 1
        %s1102 = scalar_lea.sflag [#allocation7], %s1101
        %s1103 = sand.u32 %s151, 1
        %s1104 = smul.addr %s1103, 128
        %s1105 = scalar_lea.vmem [#allocation6], %s1104
        // Predicated region
        $region57: #{tpu_custom_call.1} parent=39 // pred_check
          %p1106 = pneg %p161
        $region58: #{tpu_custom_call.1} parent=39 // pred_check_branch
          %1108 = sbr.rel (%p1106) target = $region60
        $region59: #{tpu_custom_call.1} parent=39 // pred_region
          %s1109 = smul.u32 %s23, %s24
          %s1110 = smul.u32 4, %s1109
          %s1112 = ssub.s32 2048, 2048
          %1113 = vsyncadd %s1102, %s1112
          %s1114 = smul.addr %s1110, 128
          %s1115 = scalar_lea.hbm %s5, %s1114
          %s1116 = sshll.u32 %s1105, 4
          %s1117 = int_to_ptr.vmem [resolvable:$true] %s1116
          %1122 = dma.vmem_to_hbm [thread:$0]  %s1117, 2048, %s1115, %s1102, 512, 512, 32
        $region60: #{tpu_custom_call.1} parent=39 // pred_fallthru
          _
      $region40: #{tpu_custom_call.1} parent=5 // pred_fallthru
        _
      %p1123 = scmp.le.s32.totalorder 2, %s14
      // Predicated region
      $region61: #{tpu_custom_call.1} parent=5 // pred_check
        %p1124 = pneg %p1123
      $region62: #{tpu_custom_call.1} parent=5 // pred_check_branch
        %1126 = sbr.rel (%p1124) target = $region64
      $region63: #{tpu_custom_call.1} parent=5 // pred_region
        %s1127 = ssub.s32 %s14, 2
        // Predicated region
        $region65: #{tpu_custom_call.1} parent=63 // pred_check
          %p1128 = pneg %p167
        $region66: #{tpu_custom_call.1} parent=63 // pred_check_branch
          %1130 = sbr.rel (%p1128) target = $region68
        $region67: #{tpu_custom_call.1} parent=63 // pred_region
          %s1131 = sand.u32 %s152, 1
          %s1132 = scalar_lea.sflag [#allocation7], %s1131
          %s1133 = sand.u32 %s152, 1
          %s1134 = smul.addr %s1133, 128
          %s1135 = scalar_lea.vmem [#allocation6], %s1134
          %1136 = dma.done %s1132, 2048
        $region68: #{tpu_custom_call.1} parent=63 // pred_fallthru
          _
      $region64: #{tpu_custom_call.1} parent=5 // pred_fallthru
        _
    $region6: #{tpu_custom_call.1} parent=1 // loop_footer
      %s18 = sadd.s32 1, %s14
    $region7: #{tpu_custom_call.1} parent=1 // loop_footer_branch
      %13 = sbr.rel target = $region3
    $region8: #{tpu_custom_call.1} parent=1 // loop_exit
      _
    %1137 = vsyncpa [#allocation7], 1
    %s1138 = scalar_lea.sflag [#allocation7], 1
    %1139 = vsyncpa %s1138, 1

</llo_original>
